<compile_context>
chip_gen: v5e
topology: v5e:2x2
jax: 0.10.0
libtpu: 0.0.40
codegen_flags: <defaults>
</compile_context>

<pallas_src>
import math
import jax
import jax.numpy as jnp
from jax.experimental import pallas as pl
from jax.experimental.pallas import tpu as pltpu


def _discrete_policy_kernel(x_ref, w1_ref, b1_ref, w2_ref, b2_ref,
                            w3_ref, b3_ref, out_ref):
    # Cast activations to the weight dtype so bf16 weights hit the native
    # bf16 x bf16 -> f32 MXU path; with f32 weights this is a no-op.
    x = x_ref[...].astype(w1_ref.dtype)

    # Hidden layer 1: tanh(x @ W1 + b1)   (bias add / tanh run in f32 on VPU/EUP)
    h = jnp.tanh(
        jnp.dot(x, w1_ref[...], preferred_element_type=jnp.float32)
        + b1_ref[...].astype(jnp.float32)
    )
    # Hidden layer 2: tanh(h @ W2 + b2)
    h = jnp.tanh(
        jnp.dot(h.astype(w2_ref.dtype), w2_ref[...],
                preferred_element_type=jnp.float32)
        + b2_ref[...].astype(jnp.float32)
    )
    # Action head logits
    logits = (
        jnp.dot(h.astype(w3_ref.dtype), w3_ref[...],
                preferred_element_type=jnp.float32)
        + b3_ref[...].astype(jnp.float32)
    )
    # Numerically stable softmax over the action axis (dim=1 of [B, A]).
    m = jnp.max(logits, axis=-1, keepdims=True)
    e = jnp.exp(logits - m)
    denom = jnp.sum(e, axis=-1, keepdims=True)
    # Exact reciprocal-multiply instead of vdiv (keeps the 1e-5 tolerance).
    out_ref[...] = (e * pl.reciprocal(denom)).astype(out_ref.dtype)


def discrete_policy_forward(x, params, *, block_b=512):
    """Fused MLP + softmax forward pass of DiscretePolicy as one Pallas kernel.

    Small batches (B <= block_b) run as a single gridless invocation with all
    operands whole-array resident in VMEM.  Larger batches grid over B with a
    sublane-aligned tile, keep the weights VMEM-resident across the grid, and
    mark the batch axis "parallel" for megacore sharding.
    """
    w1, b1, w2, b2, w3, b3 = params
    B, state_dim = x.shape
    action_num = w3.shape[1]
    out_shape = jax.ShapeDtypeStruct((B, action_num), jnp.float32)

    if B <= block_b:
        # Overhead-optimized path: no grid -> no pipeline scaffolding.
        vmem = pl.BlockSpec(memory_space=pltpu.MemorySpace.VMEM)
        return pl.pallas_call(
            _discrete_policy_kernel,
            out_shape=out_shape,
            in_specs=[vmem] * 7,
            out_specs=vmem,
        )(x, w1, b1, w2, b2, w3, b3)

    # Batched path: stream activation tiles, keep weights/biases resident.
    # block_b must be a multiple of 8 (f32 sublane tiling).
    assert block_b % 8 == 0
    grid = (pl.cdiv(B, block_b),)
    in_specs = [
        pl.BlockSpec((block_b, state_dim), lambda i: (i, 0)),  # x tile (streamed)
        pl.BlockSpec(w1.shape, lambda i: (0, 0)),              # resident weights
        pl.BlockSpec(b1.shape, lambda i: (0, 0)),
        pl.BlockSpec(w2.shape, lambda i: (0, 0)),
        pl.BlockSpec(b2.shape, lambda i: (0, 0)),
        pl.BlockSpec(w3.shape, lambda i: (0, 0)),
        pl.BlockSpec(b3.shape, lambda i: (0, 0)),
    ]
    out_specs = pl.BlockSpec((block_b, action_num), lambda i: (i, 0))
    return pl.pallas_call(
        _discrete_policy_kernel,
        out_shape=out_shape,
        grid=grid,
        in_specs=in_specs,
        out_specs=out_specs,
        compiler_params=pltpu.CompilerParams(
            dimension_semantics=("parallel",)   # megacore-shardable on v7x
        ),
    )(x, w1, b1, w2, b2, w3, b3)


def init_discrete_policy_params(key, state_dim, action_num, hidden_size=(128, 128)):
    """Deterministic init mimicking nn.Linear default (uniform(-1/sqrt(in), 1/sqrt(in))),
    then action_head.weight *= 0.1 and action_head.bias *= 0.0 (as in the PyTorch ctor)."""
    dims = [state_dim, *hidden_size, action_num]
    params = []
    keys = jax.random.split(key, 2 * (len(dims) - 1))
    for li in range(len(dims) - 1):
        fan_in, fan_out = dims[li], dims[li + 1]
        bound = 1.0 / math.sqrt(fan_in)
        w = jax.random.uniform(keys[2 * li], (fan_in, fan_out),
                               minval=-bound, maxval=bound, dtype=jnp.float32)
        b = jax.random.uniform(keys[2 * li + 1], (1, fan_out),
                               minval=-bound, maxval=bound, dtype=jnp.float32)
        if li == len(dims) - 2:  # action head
            w = w * 0.1
            b = b * 0.0
        params.append(w)
        params.append(b)
    return tuple(params)


def cast_weights(params, dtype):
    """Cast weight matrices to `dtype` (biases stay f32; added post-accumulate)."""
    w1, b1, w2, b2, w3, b3 = params
    return (w1.astype(dtype), b1, w2.astype(dtype), b2, w3.astype(dtype), b3)


def reference_forward(x, params):
    w1, b1, w2, b2, w3, b3 = params
    h = jnp.tanh(x @ w1.astype(jnp.float32) + b1)
    h = jnp.tanh(h @ w2.astype(jnp.float32) + b2)
    logits = h @ w3.astype(jnp.float32) + b3
    return jax.nn.softmax(logits, axis=1)


if __name__ == "__main__":
    key = jax.random.PRNGKey(0)
    k_param, k_x, k_x2 = jax.random.split(key, 3)

    state_dim, action_num, hidden_size = 32, 8, (128, 128)
    params = init_discrete_policy_params(k_param, state_dim, action_num, hidden_size)

    # --- Small batch: gridless, whole-array-VMEM path. ---
    batch = 8
    x = jax.random.normal(k_x, (batch, state_dim), dtype=jnp.float32)
    probs = jax.block_until_ready(discrete_policy_forward(x, params))
    ref = jax.block_until_ready(reference_forward(x, params))
    assert probs.shape == (batch, action_num)
    assert jnp.allclose(probs, ref, atol=1e-5, rtol=1e-5)
    assert jnp.allclose(jnp.sum(probs, axis=1), 1.0, atol=1e-5)

    # --- Larger batch: gridded path (weights resident, batch axis parallel). ---
    batch2 = 32
    x2 = jax.random.normal(k_x2, (batch2, state_dim), dtype=jnp.float32)
    probs2 = jax.block_until_ready(
        discrete_policy_forward(x2, params, block_b=8))  # small tile to exercise the grid
    ref2 = jax.block_until_ready(reference_forward(x2, params))
    assert probs2.shape == (batch2, action_num)
    assert jnp.allclose(probs2, ref2, atol=1e-5, rtol=1e-5)
    assert jnp.allclose(jnp.sum(probs2, axis=1), 1.0, atol=1e-5)

    # --- bf16 weights (native MXU dtype on v6e/v7x), f32 accumulate in-kernel. ---
    params_bf16 = cast_weights(params, jnp.bfloat16)
    probs3 = jax.block_until_ready(discrete_policy_forward(x, params_bf16))
    ref3 = jax.block_until_ready(reference_forward(x, params_bf16))
    assert jnp.allclose(probs3, ref3, atol=2e-2, rtol=2e-2)
    assert jnp.allclose(jnp.sum(probs3, axis=1), 1.0, atol=1e-2)

    print("KERNEL_OK")
</pallas_src>

<mosaic_0001>
module attributes {stable_mosaic.version = 11 : i64} {
  func.func @_discrete_policy_kernel(%arg0: memref<8x32xf32, #tpu.memory_space<vmem>>, %arg1: memref<32x128xf32, #tpu.memory_space<vmem>>, %arg2: memref<1x128xf32, #tpu.memory_space<vmem>>, %arg3: memref<128x128xf32, #tpu.memory_space<vmem>>, %arg4: memref<1x128xf32, #tpu.memory_space<vmem>>, %arg5: memref<128x8xf32, #tpu.memory_space<vmem>>, %arg6: memref<1x8xf32, #tpu.memory_space<vmem>>, %arg7: memref<8x8xf32, #tpu.memory_space<vmem>>) attributes {dimension_semantics = [], scalar_prefetch = 0 : i64, scratch_operands = 0 : i64, tpu.core_type = #tpu.core_type<tc>} {
    %c0 = arith.constant 0 : index
    %c0_0 = arith.constant 0 : index
    %0 = vector.load %arg0[%c0, %c0_0] : memref<8x32xf32, #tpu.memory_space<vmem>>, vector<8x32xf32>
    %c0_1 = arith.constant 0 : index
    %c0_2 = arith.constant 0 : index
    %1 = vector.load %arg1[%c0_1, %c0_2] : memref<32x128xf32, #tpu.memory_space<vmem>>, vector<32x128xf32>
    %cst = arith.constant dense<0.000000e+00> : vector<8x128xf32>
    %2 = tpu.matmul %0, %1, %cst {dimension_numbers = #tpu.dot_dimension_numbers<[1], [0], [0], [1], [0, 0, 1, 1], [], []>} : vector<8x32xf32>, vector<32x128xf32>, vector<8x128xf32> -> vector<8x128xf32>
    %c0_3 = arith.constant 0 : index
    %c0_4 = arith.constant 0 : index
    %3 = vector.load %arg2[%c0_3, %c0_4] : memref<1x128xf32, #tpu.memory_space<vmem>>, vector<1x128xf32>
    %4 = vector.broadcast %3 : vector<1x128xf32> to vector<8x128xf32>
    %5 = arith.addf %2, %4 : vector<8x128xf32>
    %6 = math.tanh %5 : vector<8x128xf32>
    %c0_5 = arith.constant 0 : index
    %c0_6 = arith.constant 0 : index
    %7 = vector.load %arg3[%c0_5, %c0_6] : memref<128x128xf32, #tpu.memory_space<vmem>>, vector<128x128xf32>
    %cst_7 = arith.constant dense<0.000000e+00> : vector<8x128xf32>
    %8 = tpu.matmul %6, %7, %cst_7 {dimension_numbers = #tpu.dot_dimension_numbers<[1], [0], [0], [1], [0, 0, 1, 1], [], []>} : vector<8x128xf32>, vector<128x128xf32>, vector<8x128xf32> -> vector<8x128xf32>
    %c0_8 = arith.constant 0 : index
    %c0_9 = arith.constant 0 : index
    %9 = vector.load %arg4[%c0_8, %c0_9] : memref<1x128xf32, #tpu.memory_space<vmem>>, vector<1x128xf32>
    %10 = vector.broadcast %9 : vector<1x128xf32> to vector<8x128xf32>
    %11 = arith.addf %8, %10 : vector<8x128xf32>
    %12 = math.tanh %11 : vector<8x128xf32>
    %c0_10 = arith.constant 0 : index
    %c0_11 = arith.constant 0 : index
    %13 = vector.load %arg5[%c0_10, %c0_11] : memref<128x8xf32, #tpu.memory_space<vmem>>, vector<128x8xf32>
    %cst_12 = arith.constant dense<0.000000e+00> : vector<8x8xf32>
    %14 = tpu.matmul %12, %13, %cst_12 {dimension_numbers = #tpu.dot_dimension_numbers<[1], [0], [0], [1], [0, 0, 1, 1], [], []>} : vector<8x128xf32>, vector<128x8xf32>, vector<8x8xf32> -> vector<8x8xf32>
    %c0_13 = arith.constant 0 : index
    %c0_14 = arith.constant 0 : index
    %15 = vector.load %arg6[%c0_13, %c0_14] : memref<1x8xf32, #tpu.memory_space<vmem>>, vector<1x8xf32>
    %16 = vector.broadcast %15 : vector<1x8xf32> to vector<8x8xf32>
    %17 = arith.addf %14, %16 : vector<8x8xf32>
    %cst_15 = arith.constant dense<0xFF800000> : vector<8xf32>
    %18 = vector.multi_reduction <maximumf>, %17, %cst_15 [1] : vector<8x8xf32> to vector<8xf32>
    %19 = vector.shape_cast %18 : vector<8xf32> to vector<8x1xf32>
    %20 = vector.broadcast %19 : vector<8x1xf32> to vector<8x8xf32>
    %21 = arith.subf %17, %20 : vector<8x8xf32>
    %22 = math.exp %21 : vector<8x8xf32>
    %cst_16 = arith.constant dense<0.000000e+00> : vector<8xf32>
    %23 = vector.multi_reduction <add>, %22, %cst_16 [1] : vector<8x8xf32> to vector<8xf32>
    %24 = vector.shape_cast %23 : vector<8xf32> to vector<8x1xf32>
    %25 = tpu.reciprocal %24 : vector<8x1xf32> -> vector<8x1xf32>
    %26 = vector.broadcast %25 : vector<8x1xf32> to vector<8x8xf32>
    %27 = arith.mulf %22, %26 : vector<8x8xf32>
    %c0_17 = arith.constant 0 : index
    %c0_18 = arith.constant 0 : index
    %28 = vector.load %arg7[%c0_17, %c0_18] : memref<8x8xf32, #tpu.memory_space<vmem>>, vector<8x8xf32>
    tpu.vector_store %arg7[%c0_17, %c0_18], %27 {strides = array<i32>} : memref<8x8xf32, #tpu.memory_space<vmem>>, vector<8x8xf32>,
    return
  }
}

</mosaic_0001>

<llo_original>
// kernel: tpu_custom_call.1
$region0: #{tpu_custom_call.1}
  #allocation0 [shape = 'u32[]', space=smem, size = 0x4, offset = 0x4, fixed_abs, tag = 'smem constant byte address 0x4 - core index']
  #allocation1 [shape = 'u32[72,128]{1,0:T(1,128)}', space=vmem, size = 0x9000, scoped, tag = 'internal scratch']
  %s0 = inlined_call_operand.vmem [shape: f32[8,32], index: 0, kind: input, shape index: {}]
  %s1 = inlined_call_operand.hbm [shape: f32[32,128], index: 1, kind: input, shape index: {}]
  %s2 = inlined_call_operand.vmem [shape: f32[1,128], index: 2, kind: input, shape index: {}]
  %s3 = inlined_call_operand.vmem [shape: f32[128,128], index: 3, kind: input, shape index: {}]
  %s4 = inlined_call_operand.vmem [shape: f32[1,128], index: 4, kind: input, shape index: {}]
  %s5 = inlined_call_operand.vmem [shape: f32[128,8], index: 5, kind: input, shape index: {}]
  %s6 = inlined_call_operand.vmem [shape: f32[1,8], index: 6, kind: input, shape index: {}]
  %s7 = inlined_call_operand.hbm [shape: f32[8,8], index: 7, kind: output, shape index: {}]
  %s8 = sld [smem:[#allocation0]]
  $region42: #{tpu_custom_call.1} parent=0
    _
  %s10 = ssub.s32 1, %s8
  %s11 = scalar_select 0, %s10, %s8
  $region1: #{tpu_custom_call.1} parent=0
    #allocation2 [shape = 'u8[16384]{0}', space=vmem, size = 0x4000, scoped, tag = 'input window, operand 1, single buffered']
    #allocation3 [shape = 's32[1]{0}', space=sflag, size = 0x4, scoped, tag = 'scoped memory for tpu_custom_call.1']
    #allocation4 [shape = 's32[1]{0}', space=sflag, size = 0x4, scoped, tag = 'scoped memory for tpu_custom_call.1']
    #allocation5 [shape = 'u8[4096]{0}', space=vmem, size = 0x1000, scoped, tag = 'output window, operand 0, single buffered']
    %12 = vsyncpa [#allocation3], 0
    %13 = vsyncpa [#allocation4], 0
    // Predicated region
    $region2: #{tpu_custom_call.1} parent=1 // pred_check
      _
    $region3: #{tpu_custom_call.1} parent=1 // pred_check_branch
      %15 = sbr.rel (0) target = $region5
    $region4: #{tpu_custom_call.1} parent=1 // pred_region
      _
    $region5: #{tpu_custom_call.1} parent=1 // pred_fallthru
      _
    // Predicated region
    $region6: #{tpu_custom_call.1} parent=1 // pred_check
      _
    $region7: #{tpu_custom_call.1} parent=1 // pred_check_branch
      %17 = sbr.rel (0) target = $region9
    $region8: #{tpu_custom_call.1} parent=1 // pred_region
      %19 = vsyncadd [#allocation3], 0
      %s20 = sshll.u32 %s1, 4
      %s21 = int_to_ptr.hbm [resolvable:$true] %s20
      %s22 = sshll.u32 [#allocation2], 4
      %s23 = int_to_ptr.vmem [resolvable:$true] %s22
      %28 = dma.hbm_to_vmem [thread:$0]  %s21, 512, %s23, [#allocation3], 128, 128, 8
    $region9: #{tpu_custom_call.1} parent=1 // pred_fallthru
      _
    // Predicated region
    $region10: #{tpu_custom_call.1} parent=1 // pred_check
      _
    $region11: #{tpu_custom_call.1} parent=1 // pred_check_branch
      %30 = sbr.rel (0) target = $region13
    $region12: #{tpu_custom_call.1} parent=1 // pred_region
      _
    $region13: #{tpu_custom_call.1} parent=1 // pred_fallthru
      _
    // Predicated region
    $region14: #{tpu_custom_call.1} parent=1 // pred_check
      _
    $region15: #{tpu_custom_call.1} parent=1 // pred_check_branch
      %32 = sbr.rel (0) target = $region17
    $region16: #{tpu_custom_call.1} parent=1 // pred_region
      _
    $region17: #{tpu_custom_call.1} parent=1 // pred_fallthru
      _
    // Predicated region
    $region18: #{tpu_custom_call.1} parent=1 // pred_check
      _
    $region19: #{tpu_custom_call.1} parent=1 // pred_check_branch
      %34 = sbr.rel (0) target = $region21
    $region20: #{tpu_custom_call.1} parent=1 // pred_region
      _
    $region21: #{tpu_custom_call.1} parent=1 // pred_fallthru
      _
    // Predicated region
    $region22: #{tpu_custom_call.1} parent=1 // pred_check
      _
    $region23: #{tpu_custom_call.1} parent=1 // pred_check_branch
      %36 = sbr.rel (0) target = $region25
    $region24: #{tpu_custom_call.1} parent=1 // pred_region
      _
    $region25: #{tpu_custom_call.1} parent=1 // pred_fallthru
      _
    // Predicated region
    $region26: #{tpu_custom_call.1} parent=1 // pred_check
      _
    $region27: #{tpu_custom_call.1} parent=1 // pred_check_branch
      %38 = sbr.rel (0) target = $region29
    $region28: #{tpu_custom_call.1} parent=1 // pred_region
      _
    $region29: #{tpu_custom_call.1} parent=1 // pred_fallthru
      _
    // Predicated region
    $region30: #{tpu_custom_call.1} parent=1 // pred_check
      _
    $region31: #{tpu_custom_call.1} parent=1 // pred_check_branch
      %40 = sbr.rel (0) target = $region33
    $region32: #{tpu_custom_call.1} parent=1 // pred_region
      %42 = dma.done [#allocation3], 512
    $region33: #{tpu_custom_call.1} parent=1 // pred_fallthru
      _
    %v43 = vld [vmem:[%s0] sm:$0xff]
    %v44 = vld [vmem:[#allocation2] sm:$0xff]
    %v45 = vld [vmem:[#allocation2 + $0x8] sm:$0xff]
    %v46 = vld [vmem:[#allocation2 + $0x10] sm:$0xff]
    %v47 = vld [vmem:[#allocation2 + $0x18] sm:$0xff]
    %v48 = vld [vmem:[%s2] sm:$0x1]
    %v50 = vperm.slane %v48, 0
    %vm52 = vcmask 261120
    %v54 = vsel %vm52, %v43, 0
    %56 = vmatpush.msra.mxu0 0.0
    %57 = vmatpush.msra.mxu0 0.0
    %58 = vmatpush.msra.mxu0 0.0
    %59 = vmatpush.msra.mxu0 0.0
    %60 = vmatpush.msra.mxu0 0.0
    %61 = vmatpush.msra.mxu0 0.0
    %62 = vmatpush.msra.mxu0 0.0
    %63 = vmatpush.msra.mxu0 0.0
    %64 = vmatpush.msra.mxu0 0.0
    %65 = vmatpush.msra.mxu0 0.0
    %66 = vmatpush.msra.mxu0 0.0
    %67 = vmatpush.msra.mxu0 0.0
    %68 = vmatpush.msra.mxu0 %v47
    %69 = vmatpush.msra.mxu0 %v46
    %70 = vmatpush.msra.mxu0 %v45
    %71 = vmatpush.msra.mxu0 %v44
    %72 = vmatmul.f32.gmra.mxu0 %v54
    %v73 = vpop.f32.mrf.mxu0
    %v74 = vadd.f32 %v50, %v73
    %75 = vdwg.mxu0
    %v76 = vtanh.pop %v74
    %v77 = vld [vmem:[%s3] sm:$0xff]
    %v78 = vld [vmem:[%s3 + $0x8] sm:$0xff]
    %v79 = vld [vmem:[%s3 + $0x10] sm:$0xff]
    %v80 = vld [vmem:[%s3 + $0x18] sm:$0xff]
    %v81 = vld [vmem:[%s3 + $0x20] sm:$0xff]
    %v82 = vld [vmem:[%s3 + $0x28] sm:$0xff]
    %v83 = vld [vmem:[%s3 + $0x30] sm:$0xff]
    %v84 = vld [vmem:[%s3 + $0x38] sm:$0xff]
    %v85 = vld [vmem:[%s3 + $0x40] sm:$0xff]
    %v86 = vld [vmem:[%s3 + $0x48] sm:$0xff]
    %v87 = vld [vmem:[%s3 + $0x50] sm:$0xff]
    %v88 = vld [vmem:[%s3 + $0x58] sm:$0xff]
    %v89 = vld [vmem:[%s3 + $0x60] sm:$0xff]
    %v90 = vld [vmem:[%s3 + $0x68] sm:$0xff]
    %v91 = vld [vmem:[%s3 + $0x70] sm:$0xff]
    %v92 = vld [vmem:[%s3 + $0x78] sm:$0xff]
    %v93 = vld [vmem:[%s4] sm:$0x1]
    %v95 = vperm.slane %v93, 0
    %97 = vmatpush.msra.mxu0 %v92
    %98 = vmatpush.msra.mxu0 %v91
    %99 = vmatpush.msra.mxu0 %v90
    %100 = vmatpush.msra.mxu0 %v89
    %101 = vmatpush.msra.mxu0 %v88
    %102 = vmatpush.msra.mxu0 %v87
    %103 = vmatpush.msra.mxu0 %v86
    %104 = vmatpush.msra.mxu0 %v85
    %105 = vmatpush.msra.mxu0 %v84
    %106 = vmatpush.msra.mxu0 %v83
    %107 = vmatpush.msra.mxu0 %v82
    %108 = vmatpush.msra.mxu0 %v81
    %109 = vmatpush.msra.mxu0 %v80
    %110 = vmatpush.msra.mxu0 %v79
    %111 = vmatpush.msra.mxu0 %v78
    %112 = vmatpush.msra.mxu0 %v77
    %113 = vmatmul.f32.gmra.mxu0 %v76
    %v114 = vpop.f32.mrf.mxu0
    %v115 = vadd.f32 %v95, %v114
    %116 = vdwg.mxu0
    %v117 = vtanh.pop %v115
    %v118 = vld [vmem:[%s5] sm:$0xff]
    %v119 = vld [vmem:[%s5 + $0x8] sm:$0xff]
    %v120 = vld [vmem:[%s5 + $0x10] sm:$0xff]
    %v121 = vld [vmem:[%s5 + $0x18] sm:$0xff]
    %v122 = vld [vmem:[%s5 + $0x20] sm:$0xff]
    %v123 = vld [vmem:[%s5 + $0x28] sm:$0xff]
    %v124 = vld [vmem:[%s5 + $0x30] sm:$0xff]
    %v125 = vld [vmem:[%s5 + $0x38] sm:$0xff]
    %v126 = vld [vmem:[%s5 + $0x40] sm:$0xff]
    %v127 = vld [vmem:[%s5 + $0x48] sm:$0xff]
    %v128 = vld [vmem:[%s5 + $0x50] sm:$0xff]
    %v129 = vld [vmem:[%s5 + $0x58] sm:$0xff]
    %v130 = vld [vmem:[%s5 + $0x60] sm:$0xff]
    %v131 = vld [vmem:[%s5 + $0x68] sm:$0xff]
    %v132 = vld [vmem:[%s5 + $0x70] sm:$0xff]
    %v133 = vld [vmem:[%s5 + $0x78] sm:$0xff]
    %v134 = vld [vmem:[%s6] sm:$0x1]
    %v136 = vperm.slane %v134, 0
    %138 = vmatpush.msra.mxu0 %v133
    %139 = vmatpush.msra.mxu0 %v132
    %140 = vmatpush.msra.mxu0 %v131
    %141 = vmatpush.msra.mxu0 %v130
    %142 = vmatpush.msra.mxu0 %v129
    %143 = vmatpush.msra.mxu0 %v128
    %144 = vmatpush.msra.mxu0 %v127
    %145 = vmatpush.msra.mxu0 %v126
    %146 = vmatpush.msra.mxu0 %v125
    %147 = vmatpush.msra.mxu0 %v124
    %148 = vmatpush.msra.mxu0 %v123
    %149 = vmatpush.msra.mxu0 %v122
    %150 = vmatpush.msra.mxu0 %v121
    %151 = vmatpush.msra.mxu0 %v120
    %152 = vmatpush.msra.mxu0 %v119
    %153 = vmatpush.msra.mxu0 %v118
    %154 = vmatmul.f32.gmra.mxu0 %v117
    %v155 = vpop.f32.mrf.mxu0
    %v156 = vadd.f32 %v136, %v155
    %157 = vdwg.mxu0
    %vm158 = vcmask 64512
    %v159 = vsel %vm158, %v156, -inf
    %160 = vmax.xlane.f32.xlu0 %v159
    %v161 = vpop.xlane.xlu0 %160
    %v162 = vsub.f32 %v156, %v161
    %v163 = vmul.f32 %v162, 1.442695
    %v164 = vpow.pop %v163
    %v165 = vsel %vm158, %v164, 0.0
    %166 = vadd.xlane.f32.xlu0 %v165
    %v167 = vpop.xlane.xlu0 %166
    %v168 = vrcp.pop %v167
    %v169 = vmul.f32 %v167, %v168
    %v170 = vsub.f32 1.0, %v169
    %v171 = vmul.f32 %v168, %v170
    %v172 = vadd.f32 %v168, %v171
    %vm173 = vweird.f32 %v167
    %vm174 = vweird.f32 %v168
    %vm175 = vmor %vm173, %vm174
    %v176 = vsel %vm175, %v168, %v172
    %v177 = vand.u32 2147483647, %v167
    %vm178 = vcmp.eq.f32.partialorder %v177, 8.507059e+37
    %v179 = vand.u32 %v167, 2147483648
    %v180 = vor.u32 1.1754944e-38, %v179
    %v181 = vsel %vm178, %v180, %v176
    %v182 = vmul.f32 %v164, %v181
    %183 = vst.msk [vmem:[#allocation5] sm:$0xff] %vm158, %v182
    // Predicated region
    $region34: #{tpu_custom_call.1} parent=1 // pred_check
      _
    $region35: #{tpu_custom_call.1} parent=1 // pred_check_branch
      %185 = sbr.rel (0) target = $region37
    $region36: #{tpu_custom_call.1} parent=1 // pred_region
      %187 = vsyncadd [#allocation4], 0
      %s189 = sshll.u32 [#allocation5], 4
      %s190 = int_to_ptr.vmem [resolvable:$true] %s189
      %s191 = sshll.u32 %s7, 4
      %s192 = int_to_ptr.hbm [resolvable:$true] %s191
      %194 = dma.vmem_to_hbm [thread:$0]  %s190, 128, %s192, [#allocation4]
    $region37: #{tpu_custom_call.1} parent=1 // pred_fallthru
      _
    // Predicated region
    $region38: #{tpu_custom_call.1} parent=1 // pred_check
      _
    $region39: #{tpu_custom_call.1} parent=1 // pred_check_branch
      %196 = sbr.rel (0) target = $region41
    $region40: #{tpu_custom_call.1} parent=1 // pred_region
      %198 = dma.done [#allocation4], 128
    $region41: #{tpu_custom_call.1} parent=1 // pred_fallthru
      _
    %199 = vsyncpa [#allocation3], 1
    %200 = vsyncpa [#allocation4], 1

</llo_original>
